<compile_context>
chip_gen: v5e
topology: v5e:2x2
jax: 0.10.0
libtpu: 0.0.40
codegen_flags: <defaults>
</compile_context>

<pallas_src>
import functools

import jax
import jax.numpy as jnp
from jax import lax
from jax.experimental import pallas as pl
from jax.experimental.pallas import tpu as pltpu

BN_EPS = 1e-5
LANE = 128
SUBLANE = 8


def _round_up(x, m):
    return (x + m - 1) // m * m


# ----------------------------------------------------------------------------
# Pass 1: conv-as-matmul (MXU, bf16 in / f32 acc) + per-tile partial BN stats
# ----------------------------------------------------------------------------
def _conv_stats_kernel(p_ref, w_ref, b_ref, conv_ref, stats_ref, *, m_valid, tile_m):
    # p_ref:     (TILE_M, Kf)        bf16 im2col patch tile
    # w_ref:     (Kf, Co_pad)        bf16 flattened conv weight
    # b_ref:     (1, Co_pad)         f32 conv bias
    # conv_ref:  (TILE_M, Co_pad)    f32 conv output tile (lane-dense)
    # stats_ref: (1, 8, Co_pad)      f32 per-tile partial stats (row0=sum, row1=sumsq)
    i = pl.program_id(0)

    acc = jnp.dot(p_ref[...], w_ref[...], preferred_element_type=jnp.float32)
    acc = acc + b_ref[...]
    conv_ref[...] = acc

    # Mask padded rows (M rounded up to a multiple of TILE_M) out of the statistics.
    row = i * tile_m + lax.broadcasted_iota(jnp.int32, (tile_m, 1), 0)
    valid = (row < m_valid).astype(jnp.float32)
    masked = acc * valid
    s1 = jnp.sum(masked, axis=0, keepdims=True)            # (1, Co_pad)
    s2 = jnp.sum(masked * acc, axis=0, keepdims=True)      # valid * acc * acc
    pad = jnp.zeros((SUBLANE - 2, acc.shape[1]), jnp.float32)
    stats_ref[...] = jnp.concatenate([s1, s2, pad], axis=0)[None]


# ----------------------------------------------------------------------------
# Pass 2: elementwise BatchNorm affine + SiLU
# ----------------------------------------------------------------------------
def _bn_silu_kernel(conv_ref, scale_ref, shift_ref, o_ref):
    y = conv_ref[...] * scale_ref[...] + shift_ref[...]
    # SiLU = y * sigmoid(y); exp on EUP, reciprocal off the VALU divide path.
    o_ref[...] = y * pl.reciprocal(1.0 + jnp.exp(-y))


# ----------------------------------------------------------------------------
# NHWC implementation (internal layout)
# ----------------------------------------------------------------------------
def conv_bn_silu_nhwc(x_nhwc, weight, bias, gamma, beta, *, stride, padding, tile_m=512):
    N, H, W, Cin = x_nhwc.shape
    Cout, _, kh, kw = weight.shape
    Ho = (H + 2 * padding - kh) // stride + 1
    Wo = (W + 2 * padding - kw) // stride + 1
    M = N * Ho * Wo
    Kf = kh * kw * Cin

    tile_m = _round_up(min(tile_m, _round_up(M, SUBLANE)), SUBLANE)
    M_pad = _round_up(M, tile_m)
    grid_m = M_pad // tile_m
    Co_pad = _round_up(Cout, LANE)

    # bf16 operands for the MXU; halves the HBM footprint of the patch tensor.
    x = x_nhwc.astype(jnp.bfloat16)
    xp = jnp.pad(x, ((0, 0), (padding, padding), (padding, padding), (0, 0)))

    # im2col (glue, bf16). Patch ordering is (ki, kj, cin).
    slabs = []
    for i in range(kh):
        for j in range(kw):
            slabs.append(
                lax.slice(
                    xp,
                    (0, i, j, 0),
                    (N, i + (Ho - 1) * stride + 1, j + (Wo - 1) * stride + 1, Cin),
                    (1, stride, stride, 1),
                )
            )
    patches = jnp.concatenate(slabs, axis=-1).reshape(M, Kf)
    patches = jnp.pad(patches, ((0, M_pad - M), (0, 0)))

    # Flatten weight to (ki, kj, cin) -> cout; pad Cout to a lane-dense multiple of 128.
    w_flat = jnp.transpose(weight, (2, 3, 1, 0)).reshape(Kf, Cout).astype(jnp.bfloat16)
    w_flat = jnp.pad(w_flat, ((0, 0), (0, Co_pad - Cout)))
    b_pad = jnp.pad(bias.astype(jnp.float32), (0, Co_pad - Cout)).reshape(1, Co_pad)

    kernel1 = functools.partial(_conv_stats_kernel, m_valid=M, tile_m=tile_m)
    conv, stats = pl.pallas_call(
        kernel1,
        grid=(grid_m,),
        in_specs=[
            pl.BlockSpec((tile_m, Kf), lambda i: (i, 0)),
            pl.BlockSpec((Kf, Co_pad), lambda i: (0, 0)),
            pl.BlockSpec((1, Co_pad), lambda i: (0, 0)),
        ],
        out_specs=[
            pl.BlockSpec((tile_m, Co_pad), lambda i: (i, 0)),
            pl.BlockSpec((1, SUBLANE, Co_pad), lambda i: (i, 0, 0)),
        ],
        out_shape=[
            jax.ShapeDtypeStruct((M_pad, Co_pad), jnp.float32),
            jax.ShapeDtypeStruct((grid_m, SUBLANE, Co_pad), jnp.float32),
        ],
        compiler_params=pltpu.CompilerParams(dimension_semantics=("parallel",)),
    )(patches, w_flat, b_pad)

    # Finalize BN statistics on the tiny (grid_m, Co_pad) partials in plain JAX.
    s1 = jnp.sum(stats[:, 0, :], axis=0)
    s2 = jnp.sum(stats[:, 1, :], axis=0)
    mean = s1 / M
    var = jnp.maximum(s2 / M - mean * mean, 0.0)            # biased var (train mode)
    inv_std = lax.rsqrt(var + BN_EPS)
    g = jnp.pad(gamma.astype(jnp.float32), (0, Co_pad - Cout))
    bt = jnp.pad(beta.astype(jnp.float32), (0, Co_pad - Cout))
    scale = (g * inv_std).reshape(1, Co_pad)
    shift = (bt - mean * g * inv_std).reshape(1, Co_pad)

    out = pl.pallas_call(
        _bn_silu_kernel,
        grid=(grid_m,),
        in_specs=[
            pl.BlockSpec((tile_m, Co_pad), lambda i: (i, 0)),
            pl.BlockSpec((1, Co_pad), lambda i: (0, 0)),
            pl.BlockSpec((1, Co_pad), lambda i: (0, 0)),
        ],
        out_specs=pl.BlockSpec((tile_m, Co_pad), lambda i: (i, 0)),
        out_shape=jax.ShapeDtypeStruct((M_pad, Co_pad), jnp.float32),
        compiler_params=pltpu.CompilerParams(dimension_semantics=("parallel",)),
    )(conv, scale, shift)

    return out[:M, :Cout].reshape(N, Ho, Wo, Cout)


# ----------------------------------------------------------------------------
# NCHW wrapper (PyTorch interface).  In a full Unet, stay NHWC end-to-end and
# convert only at the model input/output; this converts at the module boundary.
# ----------------------------------------------------------------------------
@functools.partial(jax.jit, static_argnames=("stride", "padding", "tile_m"))
def conv_bn_silu(x_nchw, weight, bias, gamma, beta, *, stride, padding, tile_m=512):
    x = jnp.transpose(x_nchw, (0, 2, 3, 1))
    out = conv_bn_silu_nhwc(
        x, weight, bias, gamma, beta, stride=stride, padding=padding, tile_m=tile_m
    )
    return jnp.transpose(out, (0, 3, 1, 2))


# ----------------------------------------------------------------------------
# Pure-JAX reference (mirrors the kernel's bf16 operand cast so the comparison
# isolates kernel correctness, not bf16 rounding of the inputs).
# ----------------------------------------------------------------------------
def conv_bn_silu_ref(x_nchw, weight, bias, gamma, beta, *, stride, padding):
    x = x_nchw.astype(jnp.bfloat16).astype(jnp.float32)
    w = weight.astype(jnp.bfloat16).astype(jnp.float32)
    conv = lax.conv_general_dilated(
        x, w,
        window_strides=(stride, stride),
        padding=[(padding, padding), (padding, padding)],
        dimension_numbers=("NCHW", "OIHW", "NCHW"),
    ) + bias.reshape(1, -1, 1, 1).astype(jnp.float32)
    mean = jnp.mean(conv, axis=(0, 2, 3), keepdims=True)
    var = jnp.mean((conv - mean) ** 2, axis=(0, 2, 3), keepdims=True)
    y = (conv - mean) * lax.rsqrt(var + BN_EPS)
    y = y * gamma.reshape(1, -1, 1, 1) + beta.reshape(1, -1, 1, 1)
    return y * jax.nn.sigmoid(y)


if __name__ == "__main__":
    # Small deterministic config consistent with ConvBnSiLu(in=4, out=8, k=3, s=1, p=1).
    N, Cin, H, W = 2, 4, 16, 16
    Cout, K = 8, 3

    key = jax.random.PRNGKey(0)
    kx, k_w, k_b = jax.random.split(key, 3)

    x = jax.random.normal(kx, (N, Cin, H, W), dtype=jnp.float32)

    fan_in = Cin * K * K
    bound = 1.0 / (fan_in ** 0.5)
    weight = jax.random.uniform(k_w, (Cout, Cin, K, K), minval=-bound, maxval=bound,
                                dtype=jnp.float32)
    bias = jax.random.uniform(k_b, (Cout,), minval=-bound, maxval=bound, dtype=jnp.float32)
    gamma = jnp.ones((Cout,), jnp.float32)   # BatchNorm2d.weight default
    beta = jnp.zeros((Cout,), jnp.float32)   # BatchNorm2d.bias default

    # Case 1: stride 1, pad 1; tile_m=128 -> 4-step M grid (exercises tiling).
    out = jax.block_until_ready(
        conv_bn_silu(x, weight, bias, gamma, beta, stride=1, padding=1, tile_m=128))
    ref = conv_bn_silu_ref(x, weight, bias, gamma, beta, stride=1, padding=1)
    assert out.shape == (N, Cout, H, W), out.shape
    assert jnp.allclose(out, ref, atol=1e-3, rtol=1e-3), float(jnp.max(jnp.abs(out - ref)))

    # Case 2: stride 2 with a tile that does not divide M -> exercises the padded-row
    # masking of the BatchNorm statistics.
    out2 = jax.block_until_ready(
        conv_bn_silu(x, weight, bias, gamma, beta, stride=2, padding=1, tile_m=48))
    ref2 = conv_bn_silu_ref(x, weight, bias, gamma, beta, stride=2, padding=1)
    assert out2.shape == (N, Cout, 8, 8), out2.shape
    assert jnp.allclose(out2, ref2, atol=1e-3, rtol=1e-3), float(jnp.max(jnp.abs(out2 - ref2)))

    print("KERNEL_OK")
</pallas_src>

<mosaic_0001>
module attributes {stable_mosaic.version = 11 : i64} {
  func.func @_conv_stats_kernel(%arg0: i32, %arg1: memref<128x36xbf16, #tpu.memory_space<vmem>>, %arg2: memref<36x128xbf16, #tpu.memory_space<vmem>>, %arg3: memref<1x128xf32, #tpu.memory_space<vmem>>, %arg4: memref<128x128xf32, #tpu.memory_space<vmem>>, %arg5: memref<1x8x128xf32, #tpu.memory_space<vmem>>) attributes {dimension_semantics = [#tpu.dimension_semantics<parallel>], iteration_bounds = array<i64: 4>, scalar_prefetch = 0 : i64, scratch_operands = 0 : i64, tpu.core_type = #tpu.core_type<tc>, window_params = [{transform_indices = @transform_0, window_bounds = array<i64: 128, 36>}, {pipeline_mode = #tpu.pipeline_mode<synchronous>, transform_indices = @transform_1, window_bounds = array<i64: 36, 128>}, {pipeline_mode = #tpu.pipeline_mode<synchronous>, transform_indices = @transform_2, window_bounds = array<i64: 1, 128>}, {transform_indices = @transform_3, window_bounds = array<i64: 128, 128>}, {transform_indices = @transform_4, window_bounds = array<i64: 1, 8, 128>}]} {
    %c0 = arith.constant 0 : index
    %c0_0 = arith.constant 0 : index
    %0 = vector.load %arg1[%c0, %c0_0] : memref<128x36xbf16, #tpu.memory_space<vmem>>, vector<128x36xbf16>
    %c0_1 = arith.constant 0 : index
    %c0_2 = arith.constant 0 : index
    %1 = vector.load %arg2[%c0_1, %c0_2] : memref<36x128xbf16, #tpu.memory_space<vmem>>, vector<36x128xbf16>
    %cst = arith.constant dense<0.000000e+00> : vector<128x128xf32>
    %2 = tpu.matmul %0, %1, %cst {dimension_numbers = #tpu.dot_dimension_numbers<[1], [0], [0], [1], [0, 0, 1, 1], [], []>} : vector<128x36xbf16>, vector<36x128xbf16>, vector<128x128xf32> -> vector<128x128xf32>
    %c0_3 = arith.constant 0 : index
    %c0_4 = arith.constant 0 : index
    %3 = vector.load %arg3[%c0_3, %c0_4] : memref<1x128xf32, #tpu.memory_space<vmem>>, vector<1x128xf32>
    %4 = vector.broadcast %3 : vector<1x128xf32> to vector<128x128xf32>
    %5 = arith.addf %2, %4 : vector<128x128xf32>
    %c0_5 = arith.constant 0 : index
    %c0_6 = arith.constant 0 : index
    %6 = vector.load %arg4[%c0_5, %c0_6] : memref<128x128xf32, #tpu.memory_space<vmem>>, vector<128x128xf32>
    tpu.vector_store %arg4[%c0_5, %c0_6], %5 {strides = array<i32>} : memref<128x128xf32, #tpu.memory_space<vmem>>, vector<128x128xf32>,
    %c128_i32 = arith.constant 128 : i32
    %7 = arith.muli %arg0, %c128_i32 : i32
    %8 = tpu.iota {dimensions = array<i32: 0>} : vector<128x1xi32>
    %9 = vector.broadcast %7 : i32 to vector<128x1xi32>
    %10 = arith.addi %9, %8 : vector<128x1xi32>
    %c512_i32 = arith.constant 512 : i32
    %11 = vector.broadcast %c512_i32 : i32 to vector<128x1xi32>
    %12 = arith.cmpi slt, %10, %11 : vector<128x1xi32>
    %13 = arith.extui %12 : vector<128x1xi1> to vector<128x1xi32>
    %14 = arith.sitofp %13 : vector<128x1xi32> to vector<128x1xf32>
    %15 = vector.broadcast %14 : vector<128x1xf32> to vector<128x128xf32>
    %16 = arith.mulf %5, %15 : vector<128x128xf32>
    %cst_7 = arith.constant dense<0.000000e+00> : vector<128xf32>
    %17 = vector.multi_reduction <add>, %16, %cst_7 [0] : vector<128x128xf32> to vector<128xf32>
    %18 = vector.shape_cast %17 : vector<128xf32> to vector<1x128xf32>
    %19 = arith.mulf %16, %5 : vector<128x128xf32>
    %cst_8 = arith.constant dense<0.000000e+00> : vector<128xf32>
    %20 = vector.multi_reduction <add>, %19, %cst_8 [0] : vector<128x128xf32> to vector<128xf32>
    %21 = vector.shape_cast %20 : vector<128xf32> to vector<1x128xf32>
    %cst_9 = arith.constant 0.000000e+00 : f32
    %22 = vector.broadcast %cst_9 : f32 to vector<6x128xf32>
    %23 = tpu.concatenate %18, %21, %22 in 0 : vector<1x128xf32>, vector<1x128xf32>, vector<6x128xf32> -> vector<8x128xf32>
    %24 = vector.shape_cast %23 : vector<8x128xf32> to vector<1x8x128xf32>
    %c0_10 = arith.constant 0 : index
    %c0_11 = arith.constant 0 : index
    %c0_12 = arith.constant 0 : index
    %25 = vector.load %arg5[%c0_10, %c0_11, %c0_12] : memref<1x8x128xf32, #tpu.memory_space<vmem>>, vector<1x8x128xf32>
    tpu.vector_store %arg5[%c0_10, %c0_11, %c0_12], %24 {strides = array<i32>} : memref<1x8x128xf32, #tpu.memory_space<vmem>>, vector<1x8x128xf32>,
    return
  }
  func.func @transform_0(%arg0: i32) -> (i32, i32) {
    %c0_i32 = arith.constant 0 : i32
    %c0_i32_0 = arith.constant 0 : i32
    return %arg0, %c0_i32 : i32, i32
  }
  func.func @transform_1(%arg0: i32) -> (i32, i32) {
    %c0_i32 = arith.constant 0 : i32
    %c0_i32_0 = arith.constant 0 : i32
    %c0_i32_1 = arith.constant 0 : i32
    return %c0_i32, %c0_i32_0 : i32, i32
  }
  func.func @transform_2(%arg0: i32) -> (i32, i32) {
    %c0_i32 = arith.constant 0 : i32
    %c0_i32_0 = arith.constant 0 : i32
    %c0_i32_1 = arith.constant 0 : i32
    return %c0_i32, %c0_i32_0 : i32, i32
  }
  func.func @transform_3(%arg0: i32) -> (i32, i32) {
    %c0_i32 = arith.constant 0 : i32
    %c0_i32_0 = arith.constant 0 : i32
    return %arg0, %c0_i32 : i32, i32
  }
  func.func @transform_4(%arg0: i32) -> (i32, i32, i32) {
    %c0_i32 = arith.constant 0 : i32
    %c0_i32_0 = arith.constant 0 : i32
    %c0_i32_1 = arith.constant 0 : i32
    return %arg0, %c0_i32, %c0_i32_0 : i32, i32, i32
  }
}

module attributes {stable_mosaic.version = 11 : i64} {
  func.func @_bn_silu_kernel(%arg0: i32, %arg1: memref<128x128xf32, #tpu.memory_space<vmem>>, %arg2: memref<1x128xf32, #tpu.memory_space<vmem>>, %arg3: memref<1x128xf32, #tpu.memory_space<vmem>>, %arg4: memref<128x128xf32, #tpu.memory_space<vmem>>) attributes {dimension_semantics = [#tpu.dimension_semantics<parallel>], iteration_bounds = array<i64: 4>, scalar_prefetch = 0 : i64, scratch_operands = 0 : i64, tpu.core_type = #tpu.core_type<tc>, window_params = [{transform_indices = @transform_0, window_bounds = array<i64: 128, 128>}, {pipeline_mode = #tpu.pipeline_mode<synchronous>, transform_indices = @transform_1, window_bounds = array<i64: 1, 128>}, {pipeline_mode = #tpu.pipeline_mode<synchronous>, transform_indices = @transform_2, window_bounds = array<i64: 1, 128>}, {transform_indices = @transform_3, window_bounds = array<i64: 128, 128>}]} {
    %c0 = arith.constant 0 : index
    %c0_0 = arith.constant 0 : index
    %0 = vector.load %arg1[%c0, %c0_0] : memref<128x128xf32, #tpu.memory_space<vmem>>, vector<128x128xf32>
    %c0_1 = arith.constant 0 : index
    %c0_2 = arith.constant 0 : index
    %1 = vector.load %arg2[%c0_1, %c0_2] : memref<1x128xf32, #tpu.memory_space<vmem>>, vector<1x128xf32>
    %2 = vector.broadcast %1 : vector<1x128xf32> to vector<128x128xf32>
    %3 = arith.mulf %0, %2 : vector<128x128xf32>
    %c0_3 = arith.constant 0 : index
    %c0_4 = arith.constant 0 : index
    %4 = vector.load %arg3[%c0_3, %c0_4] : memref<1x128xf32, #tpu.memory_space<vmem>>, vector<1x128xf32>
    %5 = vector.broadcast %4 : vector<1x128xf32> to vector<128x128xf32>
    %6 = arith.addf %3, %5 : vector<128x128xf32>
    %cst = arith.constant 0.000000e+00 : f32
    %7 = vector.broadcast %cst : f32 to vector<128x128xf32>
    %8 = arith.subf %7, %6 : vector<128x128xf32>
    %9 = math.exp %8 : vector<128x128xf32>
    %cst_5 = arith.constant 1.000000e+00 : f32
    %10 = vector.broadcast %cst_5 : f32 to vector<128x128xf32>
    %11 = arith.addf %10, %9 : vector<128x128xf32>
    %12 = tpu.reciprocal %11 : vector<128x128xf32> -> vector<128x128xf32>
    %13 = arith.mulf %6, %12 : vector<128x128xf32>
    %c0_6 = arith.constant 0 : index
    %c0_7 = arith.constant 0 : index
    %14 = vector.load %arg4[%c0_6, %c0_7] : memref<128x128xf32, #tpu.memory_space<vmem>>, vector<128x128xf32>
    tpu.vector_store %arg4[%c0_6, %c0_7], %13 {strides = array<i32>} : memref<128x128xf32, #tpu.memory_space<vmem>>, vector<128x128xf32>,
    return
  }
  func.func @transform_0(%arg0: i32) -> (i32, i32) {
    %c0_i32 = arith.constant 0 : i32
    %c0_i32_0 = arith.constant 0 : i32
    return %arg0, %c0_i32 : i32, i32
  }
  func.func @transform_1(%arg0: i32) -> (i32, i32) {
    %c0_i32 = arith.constant 0 : i32
    %c0_i32_0 = arith.constant 0 : i32
    %c0_i32_1 = arith.constant 0 : i32
    return %c0_i32, %c0_i32_0 : i32, i32
  }
  func.func @transform_2(%arg0: i32) -> (i32, i32) {
    %c0_i32 = arith.constant 0 : i32
    %c0_i32_0 = arith.constant 0 : i32
    %c0_i32_1 = arith.constant 0 : i32
    return %c0_i32, %c0_i32_0 : i32, i32
  }
  func.func @transform_3(%arg0: i32) -> (i32, i32) {
    %c0_i32 = arith.constant 0 : i32
    %c0_i32_0 = arith.constant 0 : i32
    return %arg0, %c0_i32 : i32, i32
  }
}

</mosaic_0001>

<llo_original>
// kernel: conv_bn_silu.3
$region0: #{conv_bn_silu.3}
  #allocation0 [shape = 'u32[]', space=smem, size = 0x4, offset = 0x4, fixed_abs, tag = 'smem constant byte address 0x4 - core index']
  #allocation1 [shape = 'u32[72,128]{1,0:T(1,128)}', space=vmem, size = 0x9000, scoped, tag = 'internal scratch']
  %s0 = inlined_call_operand.vmem [shape: f32[512,128], index: 0, kind: input, shape index: {}]
  %s1 = inlined_call_operand.vmem [shape: f32[1,128], index: 1, kind: input, shape index: {}]
  %s2 = inlined_call_operand.vmem [shape: f32[1,128], index: 2, kind: input, shape index: {}]
  %s3 = inlined_call_operand.vmem [shape: f32[512,128], index: 3, kind: output, shape index: {}]
  %s4 = sld [smem:[#allocation0]]
  $region45: #{conv_bn_silu.3} parent=0
    _
  %s6 = ssub.s32 1, %s4
  %s7 = scalar_select 0, %s6, %s4
  loop: start=0, step=1, limit=6
  $region2: #{conv_bn_silu.3} parent=0 // loop_pre_header
    _
  $region3: #{conv_bn_silu.3} parent=0 // loop_header
    %s9 = sphi 0, %s13
    %p10 = scmp.ge.s32.totalorder %s9, 6
    %s19 = sphi 0, %s21
    %s22 = sphi 0, %s19
    %s23 = sphi 0, %s22
    %s39 = sphi 0, %s23
    %s43 = sphi 0, %s43
    %s45 = sphi 0, %s43
    %s46 = sphi 0, %s45
    %s60 = sphi 0, %s46
    %s64 = sphi 0, %s64
    %s66 = sphi 0, %s64
    %s67 = sphi 0, %s66
    %s81 = sphi 0, %s67
    %s87 = sphi 0, %s89
    %s90 = sphi 0, %s87
    %s91 = sphi 0, %s90
    %s107 = sphi 0, %s91
  $region4: #{conv_bn_silu.3} parent=0 // loop_header_branch
    %12 = sbr.rel (%p10) target = $region8
  $region5: #{conv_bn_silu.3} parent=0 // loop_body
    %s14 = ssub.s32 %s9, 1
    %s15 = ssub.s32 %s9, 2
    %s16 = sadd.s32 %s9, 1
    %s17 = ssub.s32 %s9, %s16
    %p18 = scmp.eq.s32.totalorder %s17, 0
    %s20 = sadd.s32 %s19, 1
    %s21 = scalar_select %p18, %s19, %s20
    %p24 = pneg %p18
    %p25 = scmp.eq.s32.totalorder %s9, 3
    %p26 = por %p24, %p25
    %p27 = scmp.ne.s32.totalorder %s19, %s22
    %p28 = scmp.eq.s32.totalorder %s9, 0
    %p29 = por %p27, %p28
    %p30 = scmp.ne.s32.totalorder %s19, %s22
    %p31 = scmp.eq.s32.totalorder %s14, 3
    %p32 = por %p30, %p31
    %p33 = scmp.ne.s32.totalorder %s22, %s23
    %p34 = scmp.eq.s32.totalorder %s14, 0
    %p35 = por %p33, %p34
    %p36 = scmp.ne.s32.totalorder %s22, %s23
    %p37 = scmp.eq.s32.totalorder %s15, 3
    %p38 = por %p36, %p37
    %p40 = scmp.ne.s32.totalorder %s23, %s39
    %p41 = scmp.eq.s32.totalorder %s15, 0
    %p42 = por %p40, %p41
    %s44 = sadd.s32 %s43, 1
    %p47 = scmp.eq.s32.totalorder %s9, 3
    %p48 = scmp.ne.s32.totalorder %s43, %s45
    %p49 = scmp.eq.s32.totalorder %s9, 0
    %p50 = por %p48, %p49
    %p51 = scmp.ne.s32.totalorder %s43, %s45
    %p52 = scmp.eq.s32.totalorder %s14, 3
    %p53 = por %p51, %p52
    %p54 = scmp.ne.s32.totalorder %s45, %s46
    %p55 = scmp.eq.s32.totalorder %s14, 0
    %p56 = por %p54, %p55
    %p57 = scmp.ne.s32.totalorder %s45, %s46
    %p58 = scmp.eq.s32.totalorder %s15, 3
    %p59 = por %p57, %p58
    %p61 = scmp.ne.s32.totalorder %s46, %s60
    %p62 = scmp.eq.s32.totalorder %s15, 0
    %p63 = por %p61, %p62
    %s65 = sadd.s32 %s64, 1
    %p68 = scmp.eq.s32.totalorder %s9, 3
    %p69 = scmp.ne.s32.totalorder %s64, %s66
    %p70 = scmp.eq.s32.totalorder %s9, 0
    %p71 = por %p69, %p70
    %p72 = scmp.ne.s32.totalorder %s64, %s66
    %p73 = scmp.eq.s32.totalorder %s14, 3
    %p74 = por %p72, %p73
    %p75 = scmp.ne.s32.totalorder %s66, %s67
    %p76 = scmp.eq.s32.totalorder %s14, 0
    %p77 = por %p75, %p76
    %p78 = scmp.ne.s32.totalorder %s66, %s67
    %p79 = scmp.eq.s32.totalorder %s15, 3
    %p80 = por %p78, %p79
    %p82 = scmp.ne.s32.totalorder %s67, %s81
    %p83 = scmp.eq.s32.totalorder %s15, 0
    %p84 = por %p82, %p83
    %s85 = ssub.s32 %s9, %s16
    %p86 = scmp.eq.s32.totalorder %s85, 0
    %s88 = sadd.s32 %s87, 1
    %s89 = scalar_select %p86, %s87, %s88
    %p92 = pneg %p86
    %p93 = scmp.eq.s32.totalorder %s9, 3
    %p94 = por %p92, %p93
    %p95 = scmp.ne.s32.totalorder %s87, %s90
    %p96 = scmp.eq.s32.totalorder %s9, 0
    %p97 = por %p95, %p96
    %p98 = scmp.ne.s32.totalorder %s87, %s90
    %p99 = scmp.eq.s32.totalorder %s14, 3
    %p100 = por %p98, %p99
    %p101 = scmp.ne.s32.totalorder %s90, %s91
    %p102 = scmp.eq.s32.totalorder %s14, 0
    %p103 = por %p101, %p102
    %p104 = scmp.ne.s32.totalorder %s90, %s91
    %p105 = scmp.eq.s32.totalorder %s15, 3
    %p106 = por %p104, %p105
    %p108 = scmp.ne.s32.totalorder %s91, %s107
    %p109 = scmp.eq.s32.totalorder %s15, 0
    %p110 = por %p108, %p109
    %p111 = scmp.le.s32.totalorder 1, %s9
    %p112 = scmp.lt.s32.totalorder %s9, 5
    %p113 = pnand %p111, %p112
    %p114 = pneg %p113
    // Predicated region
    $region9: #{conv_bn_silu.3} parent=5 // pred_check
      _
    $region10: #{conv_bn_silu.3} parent=5 // pred_check_branch
      %116 = sbr.rel (%p113) target = $region12
    $region11: #{conv_bn_silu.3} parent=5 // pred_region
      %s117 = ssub.s32 %s9, 1
      // Predicated region
      $region13: #{conv_bn_silu.3} parent=11 // pred_check
        %p118 = pneg %p56
      $region14: #{conv_bn_silu.3} parent=11 // pred_check_branch
        %120 = sbr.rel (%p118) target = $region16
      $region15: #{conv_bn_silu.3} parent=11 // pred_region
        _
      $region16: #{conv_bn_silu.3} parent=11 // pred_fallthru
        _
      // Predicated region
      $region17: #{conv_bn_silu.3} parent=11 // pred_check
        %p121 = pneg %p77
      $region18: #{conv_bn_silu.3} parent=11 // pred_check_branch
        %123 = sbr.rel (%p121) target = $region20
      $region19: #{conv_bn_silu.3} parent=11 // pred_region
        _
      $region20: #{conv_bn_silu.3} parent=11 // pred_fallthru
        _
    $region12: #{conv_bn_silu.3} parent=5 // pred_fallthru
      _
    %p124 = scmp.lt.s32.totalorder %s9, 4
    // Predicated region
    $region21: #{conv_bn_silu.3} parent=5 // pred_check
      %p125 = pneg %p124
    $region22: #{conv_bn_silu.3} parent=5 // pred_check_branch
      %127 = sbr.rel (%p125) target = $region24
    $region23: #{conv_bn_silu.3} parent=5 // pred_region
      // Predicated region
      $region25: #{conv_bn_silu.3} parent=23 // pred_check
        %p128 = pneg %p29
      $region26: #{conv_bn_silu.3} parent=23 // pred_check_branch
        %130 = sbr.rel (%p128) target = $region28
      $region27: #{conv_bn_silu.3} parent=23 // pred_region
        %s131 = smul.u32 16, %s9
        %p132 = scmp.lt.s32.totalorder %s131, 63
        %s133 = scalar_select %p132, %s131, 63
        %s134 = smul.addr %s133, 8
        %s135 = scalar_lea.vmem %s0, %s134
        %s136 = smul.u32 16, %s9
      $region28: #{conv_bn_silu.3} parent=23 // pred_fallthru
        _
    $region24: #{conv_bn_silu.3} parent=5 // pred_fallthru
      _
    %p137 = scmp.le.s32.totalorder 1, %s9
    %p138 = scmp.lt.s32.totalorder %s9, 5
    %p139 = pnand %p137, %p138
    %p140 = pneg %p139
    // Predicated region
    $region29: #{conv_bn_silu.3} parent=5 // pred_check
      _
    $region30: #{conv_bn_silu.3} parent=5 // pred_check_branch
      %142 = sbr.rel (%p139) target = $region32
    $region31: #{conv_bn_silu.3} parent=5 // pred_region
      %s143 = ssub.s32 %s9, 1
      %s144 = smul.u32 16, %s14
      %p145 = scmp.lt.s32.totalorder %s144, 63
      %s146 = scalar_select %p145, %s144, 63
      %s147 = smul.addr %s146, 8
      %s148 = scalar_lea.vmem %s0, %s147
      %p149 = pneg %p35
      %p150 = pneg %p32
      %p151 = pneg %p56
      %p152 = pneg %p53
      %p153 = pneg %p77
      %p154 = pneg %p74
      %p155 = pneg %p103
      %p156 = pneg %p100
      %s157 = smul.u32 16, %s14
      %p158 = scmp.lt.s32.totalorder %s157, 63
      %s159 = scalar_select %p158, %s157, 63
      %s160 = smul.addr %s159, 8
      %s161 = scalar_lea.vmem %s3, %s160
      %s162 = smul.u32 16, %s14
      %p163 = scmp.lt.s32.totalorder %s162, 63
      %s164 = scalar_select %p163, %s162, 63
      %s165 = smul.addr %s164, 8
      %s166 = scalar_lea.vmem %s0, %s165
      %s167 = smul.u32 16, %s14
      %s168 = smul.u32 16, %s14
      %p169 = scmp.lt.s32.totalorder %s168, 63
      %s170 = scalar_select %p169, %s168, 63
      %s171 = smul.addr %s170, 8
      %s172 = scalar_lea.vmem %s3, %s171
      %s173 = smul.u32 16, %s14
      %v174 = vld [vmem:[%s166] sm:$0xff]
      %v175 = vld [vmem:[%s166 + $0x8] sm:$0xff]
      %v176 = vld [vmem:[%s166 + $0x10] sm:$0xff]
      %v177 = vld [vmem:[%s166 + $0x18] sm:$0xff]
      %v178 = vld [vmem:[%s166 + $0x20] sm:$0xff]
      %v179 = vld [vmem:[%s166 + $0x28] sm:$0xff]
      %v180 = vld [vmem:[%s166 + $0x30] sm:$0xff]
      %v181 = vld [vmem:[%s166 + $0x38] sm:$0xff]
      %v182 = vld [vmem:[%s166 + $0x40] sm:$0xff]
      %v183 = vld [vmem:[%s166 + $0x48] sm:$0xff]
      %v184 = vld [vmem:[%s166 + $0x50] sm:$0xff]
      %v185 = vld [vmem:[%s166 + $0x58] sm:$0xff]
      %v186 = vld [vmem:[%s166 + $0x60] sm:$0xff]
      %v187 = vld [vmem:[%s166 + $0x68] sm:$0xff]
      %v188 = vld [vmem:[%s166 + $0x70] sm:$0xff]
      %v189 = vld [vmem:[%s166 + $0x78] sm:$0xff]
      %v190 = vld [vmem:[%s1] sm:$0x1]
      %v192 = vperm.slane %v190, 0
      %v194 = vmul.f32 %v174, %v192
      %v195 = vmul.f32 %v175, %v192
      %v196 = vmul.f32 %v176, %v192
      %v197 = vmul.f32 %v177, %v192
      %v198 = vmul.f32 %v178, %v192
      %v199 = vmul.f32 %v179, %v192
      %v200 = vmul.f32 %v180, %v192
      %v201 = vmul.f32 %v181, %v192
      %v202 = vmul.f32 %v182, %v192
      %v203 = vmul.f32 %v183, %v192
      %v204 = vmul.f32 %v184, %v192
      %v205 = vmul.f32 %v185, %v192
      %v206 = vmul.f32 %v186, %v192
      %v207 = vmul.f32 %v187, %v192
      %v208 = vmul.f32 %v188, %v192
      %v209 = vmul.f32 %v189, %v192
      %v210 = vld [vmem:[%s2] sm:$0x1]
      %v212 = vperm.slane %v210, 0
      %v214 = vadd.f32 %v194, %v212
      %v215 = vadd.f32 %v195, %v212
      %v216 = vadd.f32 %v196, %v212
      %v217 = vadd.f32 %v197, %v212
      %v218 = vadd.f32 %v198, %v212
      %v219 = vadd.f32 %v199, %v212
      %v220 = vadd.f32 %v200, %v212
      %v221 = vadd.f32 %v201, %v212
      %v222 = vadd.f32 %v202, %v212
      %v223 = vadd.f32 %v203, %v212
      %v224 = vadd.f32 %v204, %v212
      %v225 = vadd.f32 %v205, %v212
      %v226 = vadd.f32 %v206, %v212
      %v227 = vadd.f32 %v207, %v212
      %v228 = vadd.f32 %v208, %v212
      %v229 = vadd.f32 %v209, %v212
      %v230 = vsub.f32 0.0, %v214
      %v231 = vsub.f32 0.0, %v215
      %v232 = vsub.f32 0.0, %v216
      %v233 = vsub.f32 0.0, %v217
      %v234 = vsub.f32 0.0, %v218
      %v235 = vsub.f32 0.0, %v219
      %v236 = vsub.f32 0.0, %v220
      %v237 = vsub.f32 0.0, %v221
      %v238 = vsub.f32 0.0, %v222
      %v239 = vsub.f32 0.0, %v223
      %v240 = vsub.f32 0.0, %v224
      %v241 = vsub.f32 0.0, %v225
      %v242 = vsub.f32 0.0, %v226
      %v243 = vsub.f32 0.0, %v227
      %v244 = vsub.f32 0.0, %v228
      %v245 = vsub.f32 0.0, %v229
      %v246 = vmul.f32 %v230, 1.442695
      %v247 = vpow.pop %v246
      %v248 = vmul.f32 %v231, 1.442695
      %v249 = vpow.pop %v248
      %v250 = vmul.f32 %v232, 1.442695
      %v251 = vpow.pop %v250
      %v252 = vmul.f32 %v233, 1.442695
      %v253 = vpow.pop %v252
      %v254 = vmul.f32 %v234, 1.442695
      %v255 = vpow.pop %v254
      %v256 = vmul.f32 %v235, 1.442695
      %v257 = vpow.pop %v256
      %v258 = vmul.f32 %v236, 1.442695
      %v259 = vpow.pop %v258
      %v260 = vmul.f32 %v237, 1.442695
      %v261 = vpow.pop %v260
      %v262 = vmul.f32 %v238, 1.442695
      %v263 = vpow.pop %v262
      %v264 = vmul.f32 %v239, 1.442695
      %v265 = vpow.pop %v264
      %v266 = vmul.f32 %v240, 1.442695
      %v267 = vpow.pop %v266
      %v268 = vmul.f32 %v241, 1.442695
      %v269 = vpow.pop %v268
      %v270 = vmul.f32 %v242, 1.442695
      %v271 = vpow.pop %v270
      %v272 = vmul.f32 %v243, 1.442695
      %v273 = vpow.pop %v272
      %v274 = vmul.f32 %v244, 1.442695
      %v275 = vpow.pop %v274
      %v276 = vmul.f32 %v245, 1.442695
      %v277 = vpow.pop %v276
      %v278 = vadd.f32 %v247, 1.0
      %v279 = vadd.f32 %v249, 1.0
      %v280 = vadd.f32 %v251, 1.0
      %v281 = vadd.f32 %v253, 1.0
      %v282 = vadd.f32 %v255, 1.0
      %v283 = vadd.f32 %v257, 1.0
      %v284 = vadd.f32 %v259, 1.0
      %v285 = vadd.f32 %v261, 1.0
      %v286 = vadd.f32 %v263, 1.0
      %v287 = vadd.f32 %v265, 1.0
      %v288 = vadd.f32 %v267, 1.0
      %v289 = vadd.f32 %v269, 1.0
      %v290 = vadd.f32 %v271, 1.0
      %v291 = vadd.f32 %v273, 1.0
      %v292 = vadd.f32 %v275, 1.0
      %v293 = vadd.f32 %v277, 1.0
      %v294 = vrcp.pop %v278
      %v295 = vmul.f32 %v278, %v294
      %v296 = vsub.f32 1.0, %v295
      %v297 = vmul.f32 %v294, %v296
      %v298 = vadd.f32 %v294, %v297
      %vm299 = vweird.f32 %v278
      %vm300 = vweird.f32 %v294
      %vm301 = vmor %vm299, %vm300
      %v302 = vsel %vm301, %v294, %v298
      %v303 = vand.u32 2147483647, %v278
      %vm304 = vcmp.eq.f32.partialorder %v303, 8.507059e+37
      %v305 = vand.u32 %v278, 2147483648
      %v306 = vor.u32 1.1754944e-38, %v305
      %v307 = vsel %vm304, %v306, %v302
      %v308 = vrcp.pop %v279
      %v309 = vmul.f32 %v279, %v308
      %v310 = vsub.f32 1.0, %v309
      %v311 = vmul.f32 %v308, %v310
      %v312 = vadd.f32 %v308, %v311
      %vm313 = vweird.f32 %v279
      %vm314 = vweird.f32 %v308
      %vm315 = vmor %vm313, %vm314
      %v316 = vsel %vm315, %v308, %v312
      %v317 = vand.u32 2147483647, %v279
      %vm318 = vcmp.eq.f32.partialorder %v317, 8.507059e+37
      %v319 = vand.u32 %v279, 2147483648
      %v320 = vor.u32 1.1754944e-38, %v319
      %v321 = vsel %vm318, %v320, %v316
      %v322 = vrcp.pop %v280
      %v323 = vmul.f32 %v280, %v322
      %v324 = vsub.f32 1.0, %v323
      %v325 = vmul.f32 %v322, %v324
      %v326 = vadd.f32 %v322, %v325
      %vm327 = vweird.f32 %v280
      %vm328 = vweird.f32 %v322
      %vm329 = vmor %vm327, %vm328
      %v330 = vsel %vm329, %v322, %v326
      %v331 = vand.u32 2147483647, %v280
      %vm332 = vcmp.eq.f32.partialorder %v331, 8.507059e+37
      %v333 = vand.u32 %v280, 2147483648
      %v334 = vor.u32 1.1754944e-38, %v333
      %v335 = vsel %vm332, %v334, %v330
      %v336 = vrcp.pop %v281
      %v337 = vmul.f32 %v281, %v336
      %v338 = vsub.f32 1.0, %v337
      %v339 = vmul.f32 %v336, %v338
      %v340 = vadd.f32 %v336, %v339
      %vm341 = vweird.f32 %v281
      %vm342 = vweird.f32 %v336
      %vm343 = vmor %vm341, %vm342
      %v344 = vsel %vm343, %v336, %v340
      %v345 = vand.u32 2147483647, %v281
      %vm346 = vcmp.eq.f32.partialorder %v345, 8.507059e+37
      %v347 = vand.u32 %v281, 2147483648
      %v348 = vor.u32 1.1754944e-38, %v347
      %v349 = vsel %vm346, %v348, %v344
      %v350 = vrcp.pop %v282
      %v351 = vmul.f32 %v282, %v350
      %v352 = vsub.f32 1.0, %v351
      %v353 = vmul.f32 %v350, %v352
      %v354 = vadd.f32 %v350, %v353
      %vm355 = vweird.f32 %v282
      %vm356 = vweird.f32 %v350
      %vm357 = vmor %vm355, %vm356
      %v358 = vsel %vm357, %v350, %v354
      %v359 = vand.u32 2147483647, %v282
      %vm360 = vcmp.eq.f32.partialorder %v359, 8.507059e+37
      %v361 = vand.u32 %v282, 2147483648
      %v362 = vor.u32 1.1754944e-38, %v361
      %v363 = vsel %vm360, %v362, %v358
      %v364 = vrcp.pop %v283
      %v365 = vmul.f32 %v283, %v364
      %v366 = vsub.f32 1.0, %v365
      %v367 = vmul.f32 %v364, %v366
      %v368 = vadd.f32 %v364, %v367
      %vm369 = vweird.f32 %v283
      %vm370 = vweird.f32 %v364
      %vm371 = vmor %vm369, %vm370
      %v372 = vsel %vm371, %v364, %v368
      %v373 = vand.u32 2147483647, %v283
      %vm374 = vcmp.eq.f32.partialorder %v373, 8.507059e+37
      %v375 = vand.u32 %v283, 2147483648
      %v376 = vor.u32 1.1754944e-38, %v375
      %v377 = vsel %vm374, %v376, %v372
      %v378 = vrcp.pop %v284
      %v379 = vmul.f32 %v284, %v378
      %v380 = vsub.f32 1.0, %v379
      %v381 = vmul.f32 %v378, %v380
      %v382 = vadd.f32 %v378, %v381
      %vm383 = vweird.f32 %v284
      %vm384 = vweird.f32 %v378
      %vm385 = vmor %vm383, %vm384
      %v386 = vsel %vm385, %v378, %v382
      %v387 = vand.u32 2147483647, %v284
      %vm388 = vcmp.eq.f32.partialorder %v387, 8.507059e+37
      %v389 = vand.u32 %v284, 2147483648
      %v390 = vor.u32 1.1754944e-38, %v389
      %v391 = vsel %vm388, %v390, %v386
      %v392 = vrcp.pop %v285
      %v393 = vmul.f32 %v285, %v392
      %v394 = vsub.f32 1.0, %v393
      %v395 = vmul.f32 %v392, %v394
      %v396 = vadd.f32 %v392, %v395
      %vm397 = vweird.f32 %v285
      %vm398 = vweird.f32 %v392
      %vm399 = vmor %vm397, %vm398
      %v400 = vsel %vm399, %v392, %v396
      %v401 = vand.u32 2147483647, %v285
      %vm402 = vcmp.eq.f32.partialorder %v401, 8.507059e+37
      %v403 = vand.u32 %v285, 2147483648
      %v404 = vor.u32 1.1754944e-38, %v403
      %v405 = vsel %vm402, %v404, %v400
      %v406 = vrcp.pop %v286
      %v407 = vmul.f32 %v286, %v406
      %v408 = vsub.f32 1.0, %v407
      %v409 = vmul.f32 %v406, %v408
      %v410 = vadd.f32 %v406, %v409
      %vm411 = vweird.f32 %v286
      %vm412 = vweird.f32 %v406
      %vm413 = vmor %vm411, %vm412
      %v414 = vsel %vm413, %v406, %v410
      %v415 = vand.u32 2147483647, %v286
      %vm416 = vcmp.eq.f32.partialorder %v415, 8.507059e+37
      %v417 = vand.u32 %v286, 2147483648
      %v418 = vor.u32 1.1754944e-38, %v417
      %v419 = vsel %vm416, %v418, %v414
      %v420 = vrcp.pop %v287
      %v421 = vmul.f32 %v287, %v420
      %v422 = vsub.f32 1.0, %v421
      %v423 = vmul.f32 %v420, %v422
      %v424 = vadd.f32 %v420, %v423
      %vm425 = vweird.f32 %v287
      %vm426 = vweird.f32 %v420
      %vm427 = vmor %vm425, %vm426
      %v428 = vsel %vm427, %v420, %v424
      %v429 = vand.u32 2147483647, %v287
      %vm430 = vcmp.eq.f32.partialorder %v429, 8.507059e+37
      %v431 = vand.u32 %v287, 2147483648
      %v432 = vor.u32 1.1754944e-38, %v431
      %v433 = vsel %vm430, %v432, %v428
      %v434 = vrcp.pop %v288
      %v435 = vmul.f32 %v288, %v434
      %v436 = vsub.f32 1.0, %v435
      %v437 = vmul.f32 %v434, %v436
      %v438 = vadd.f32 %v434, %v437
      %vm439 = vweird.f32 %v288
      %vm440 = vweird.f32 %v434
      %vm441 = vmor %vm439, %vm440
      %v442 = vsel %vm441, %v434, %v438
      %v443 = vand.u32 2147483647, %v288
      %vm444 = vcmp.eq.f32.partialorder %v443, 8.507059e+37
      %v445 = vand.u32 %v288, 2147483648
      %v446 = vor.u32 1.1754944e-38, %v445
      %v447 = vsel %vm444, %v446, %v442
      %v448 = vrcp.pop %v289
      %v449 = vmul.f32 %v289, %v448
      %v450 = vsub.f32 1.0, %v449
      %v451 = vmul.f32 %v448, %v450
      %v452 = vadd.f32 %v448, %v451
      %vm453 = vweird.f32 %v289
      %vm454 = vweird.f32 %v448
      %vm455 = vmor %vm453, %vm454
      %v456 = vsel %vm455, %v448, %v452
      %v457 = vand.u32 2147483647, %v289
      %vm458 = vcmp.eq.f32.partialorder %v457, 8.507059e+37
      %v459 = vand.u32 %v289, 2147483648
      %v460 = vor.u32 1.1754944e-38, %v459
      %v461 = vsel %vm458, %v460, %v456
      %v462 = vrcp.pop %v290
      %v463 = vmul.f32 %v290, %v462
      %v464 = vsub.f32 1.0, %v463
      %v465 = vmul.f32 %v462, %v464
      %v466 = vadd.f32 %v462, %v465
      %vm467 = vweird.f32 %v290
      %vm468 = vweird.f32 %v462
      %vm469 = vmor %vm467, %vm468
      %v470 = vsel %vm469, %v462, %v466
      %v471 = vand.u32 2147483647, %v290
      %vm472 = vcmp.eq.f32.partialorder %v471, 8.507059e+37
      %v473 = vand.u32 %v290, 2147483648
      %v474 = vor.u32 1.1754944e-38, %v473
      %v475 = vsel %vm472, %v474, %v470
      %v476 = vrcp.pop %v291
      %v477 = vmul.f32 %v291, %v476
      %v478 = vsub.f32 1.0, %v477
      %v479 = vmul.f32 %v476, %v478
      %v480 = vadd.f32 %v476, %v479
      %vm481 = vweird.f32 %v291
      %vm482 = vweird.f32 %v476
      %vm483 = vmor %vm481, %vm482
      %v484 = vsel %vm483, %v476, %v480
      %v485 = vand.u32 2147483647, %v291
      %vm486 = vcmp.eq.f32.partialorder %v485, 8.507059e+37
      %v487 = vand.u32 %v291, 2147483648
      %v488 = vor.u32 1.1754944e-38, %v487
      %v489 = vsel %vm486, %v488, %v484
      %v490 = vrcp.pop %v292
      %v491 = vmul.f32 %v292, %v490
      %v492 = vsub.f32 1.0, %v491
      %v493 = vmul.f32 %v490, %v492
      %v494 = vadd.f32 %v490, %v493
      %vm495 = vweird.f32 %v292
      %vm496 = vweird.f32 %v490
      %vm497 = vmor %vm495, %vm496
      %v498 = vsel %vm497, %v490, %v494
      %v499 = vand.u32 2147483647, %v292
      %vm500 = vcmp.eq.f32.partialorder %v499, 8.507059e+37
      %v501 = vand.u32 %v292, 2147483648
      %v502 = vor.u32 1.1754944e-38, %v501
      %v503 = vsel %vm500, %v502, %v498
      %v504 = vrcp.pop %v293
      %v505 = vmul.f32 %v293, %v504
      %v506 = vsub.f32 1.0, %v505
      %v507 = vmul.f32 %v504, %v506
      %v508 = vadd.f32 %v504, %v507
      %vm509 = vweird.f32 %v293
      %vm510 = vweird.f32 %v504
      %vm511 = vmor %vm509, %vm510
      %v512 = vsel %vm511, %v504, %v508
      %v513 = vand.u32 2147483647, %v293
      %vm514 = vcmp.eq.f32.partialorder %v513, 8.507059e+37
      %v515 = vand.u32 %v293, 2147483648
      %v516 = vor.u32 1.1754944e-38, %v515
      %v517 = vsel %vm514, %v516, %v512
      %v518 = vmul.f32 %v214, %v307
      %v519 = vmul.f32 %v215, %v321
      %v520 = vmul.f32 %v216, %v335
      %v521 = vmul.f32 %v217, %v349
      %v522 = vmul.f32 %v218, %v363
      %v523 = vmul.f32 %v219, %v377
      %v524 = vmul.f32 %v220, %v391
      %v525 = vmul.f32 %v221, %v405
      %v526 = vmul.f32 %v222, %v419
      %v527 = vmul.f32 %v223, %v433
      %v528 = vmul.f32 %v224, %v447
      %v529 = vmul.f32 %v225, %v461
      %v530 = vmul.f32 %v226, %v475
      %v531 = vmul.f32 %v227, %v489
      %v532 = vmul.f32 %v228, %v503
      %v533 = vmul.f32 %v229, %v517
      %534 = vst [vmem:[%s172] sm:$0xff] %v518
      %535 = vst [vmem:[%s172 + $0x8] sm:$0xff] %v519
      %536 = vst [vmem:[%s172 + $0x10] sm:$0xff] %v520
      %537 = vst [vmem:[%s172 + $0x18] sm:$0xff] %v521
      %538 = vst [vmem:[%s172 + $0x20] sm:$0xff] %v522
      %539 = vst [vmem:[%s172 + $0x28] sm:$0xff] %v523
      %540 = vst [vmem:[%s172 + $0x30] sm:$0xff] %v524
      %541 = vst [vmem:[%s172 + $0x38] sm:$0xff] %v525
      %542 = vst [vmem:[%s172 + $0x40] sm:$0xff] %v526
      %543 = vst [vmem:[%s172 + $0x48] sm:$0xff] %v527
      %544 = vst [vmem:[%s172 + $0x50] sm:$0xff] %v528
      %545 = vst [vmem:[%s172 + $0x58] sm:$0xff] %v529
      %546 = vst [vmem:[%s172 + $0x60] sm:$0xff] %v530
      %547 = vst [vmem:[%s172 + $0x68] sm:$0xff] %v531
      %548 = vst [vmem:[%s172 + $0x70] sm:$0xff] %v532
      %549 = vst [vmem:[%s172 + $0x78] sm:$0xff] %v533
      %s550 = smul.u32 16, %s14
      %p551 = scmp.lt.s32.totalorder %s550, 63
      %s552 = scalar_select %p551, %s550, 63
      %s553 = smul.addr %s552, 8
      %s554 = scalar_lea.vmem %s3, %s553
      // Predicated region
      $region33: #{conv_bn_silu.3} parent=31 // pred_check
        %p555 = pneg %p100
      $region34: #{conv_bn_silu.3} parent=31 // pred_check_branch
        %557 = sbr.rel (%p555) target = $region36
      $region35: #{conv_bn_silu.3} parent=31 // pred_region
        %s558 = smul.u32 16, %s14
      $region36: #{conv_bn_silu.3} parent=31 // pred_fallthru
        _
    $region32: #{conv_bn_silu.3} parent=5 // pred_fallthru
      _
    %p559 = scmp.le.s32.totalorder 2, %s9
    // Predicated region
    $region37: #{conv_bn_silu.3} parent=5 // pred_check
      %p560 = pneg %p559
    $region38: #{conv_bn_silu.3} parent=5 // pred_check_branch
      %562 = sbr.rel (%p560) target = $region40
    $region39: #{conv_bn_silu.3} parent=5 // pred_region
      %s563 = ssub.s32 %s9, 2
      // Predicated region
      $region41: #{conv_bn_silu.3} parent=39 // pred_check
        %p564 = pneg %p106
      $region42: #{conv_bn_silu.3} parent=39 // pred_check_branch
        %566 = sbr.rel (%p564) target = $region44
      $region43: #{conv_bn_silu.3} parent=39 // pred_region
        %s567 = smul.u32 16, %s15
        %p568 = scmp.lt.s32.totalorder %s567, 63
        %s569 = scalar_select %p568, %s567, 63
        %s570 = smul.addr %s569, 8
        %s571 = scalar_lea.vmem %s3, %s570
      $region44: #{conv_bn_silu.3} parent=39 // pred_fallthru
        _
    $region40: #{conv_bn_silu.3} parent=5 // pred_fallthru
      _
  $region6: #{conv_bn_silu.3} parent=0 // loop_footer
    %s13 = sadd.s32 1, %s9
  $region7: #{conv_bn_silu.3} parent=0 // loop_footer_branch
    %8 = sbr.rel target = $region3
  $region8: #{conv_bn_silu.3} parent=0 // loop_exit
    _

// kernel: conv_bn_silu.2
$region0: #{conv_bn_silu.2}
  #allocation0 [shape = 'u32[]', space=smem, size = 0x4, offset = 0x4, fixed_abs, tag = 'smem constant byte address 0x4 - core index']
  #allocation1 [shape = 'u32[72,128]{1,0:T(1,128)}', space=vmem, size = 0x9000, scoped, tag = 'internal scratch']
  %s0 = inlined_call_operand.vmem [shape: bf16[512,36], index: 0, kind: input, shape index: {}]
  %s1 = inlined_call_operand.vmem [shape: bf16[36,128], index: 1, kind: input, shape index: {}]
  %s2 = inlined_call_operand.vmem [shape: f32[1,128], index: 2, kind: input, shape index: {}]
  %s3 = inlined_call_operand.vmem [shape: f32[512,128], index: 3, kind: output, shape index: {0}]
  %s4 = inlined_call_operand.vmem [shape: f32[4,8,128], index: 4, kind: output, shape index: {1}]
  %5 = xla_tuple %s3, %s4
  %s6 = sld [smem:[#allocation0]]
  $region53: #{conv_bn_silu.2} parent=0
    _
  %s8 = ssub.s32 1, %s6
  %s9 = scalar_select 0, %s8, %s6
  loop: start=0, step=1, limit=6
  $region2: #{conv_bn_silu.2} parent=0 // loop_pre_header
    _
  $region3: #{conv_bn_silu.2} parent=0 // loop_header
    %s11 = sphi 0, %s15
    %p12 = scmp.ge.s32.totalorder %s11, 6
    %s21 = sphi 0, %s23
    %s24 = sphi 0, %s21
    %s25 = sphi 0, %s24
    %s41 = sphi 0, %s25
    %s45 = sphi 0, %s45
    %s47 = sphi 0, %s45
    %s48 = sphi 0, %s47
    %s62 = sphi 0, %s48
    %s66 = sphi 0, %s66
    %s68 = sphi 0, %s66
    %s69 = sphi 0, %s68
    %s83 = sphi 0, %s69
    %s89 = sphi 0, %s91
    %s92 = sphi 0, %s89
    %s93 = sphi 0, %s92
    %s109 = sphi 0, %s93
    %s115 = sphi 0, %s117
    %s118 = sphi 0, %s115
    %s119 = sphi 0, %s118
    %s135 = sphi 0, %s119
  $region4: #{conv_bn_silu.2} parent=0 // loop_header_branch
    %14 = sbr.rel (%p12) target = $region8
  $region5: #{conv_bn_silu.2} parent=0 // loop_body
    %s16 = ssub.s32 %s11, 1
    %s17 = ssub.s32 %s11, 2
    %s18 = sadd.s32 %s11, 1
    %s19 = ssub.s32 %s11, %s18
    %p20 = scmp.eq.s32.totalorder %s19, 0
    %s22 = sadd.s32 %s21, 1
    %s23 = scalar_select %p20, %s21, %s22
    %p26 = pneg %p20
    %p27 = scmp.eq.s32.totalorder %s11, 3
    %p28 = por %p26, %p27
    %p29 = scmp.ne.s32.totalorder %s21, %s24
    %p30 = scmp.eq.s32.totalorder %s11, 0
    %p31 = por %p29, %p30
    %p32 = scmp.ne.s32.totalorder %s21, %s24
    %p33 = scmp.eq.s32.totalorder %s16, 3
    %p34 = por %p32, %p33
    %p35 = scmp.ne.s32.totalorder %s24, %s25
    %p36 = scmp.eq.s32.totalorder %s16, 0
    %p37 = por %p35, %p36
    %p38 = scmp.ne.s32.totalorder %s24, %s25
    %p39 = scmp.eq.s32.totalorder %s17, 3
    %p40 = por %p38, %p39
    %p42 = scmp.ne.s32.totalorder %s25, %s41
    %p43 = scmp.eq.s32.totalorder %s17, 0
    %p44 = por %p42, %p43
    %s46 = sadd.s32 %s45, 1
    %p49 = scmp.eq.s32.totalorder %s11, 3
    %p50 = scmp.ne.s32.totalorder %s45, %s47
    %p51 = scmp.eq.s32.totalorder %s11, 0
    %p52 = por %p50, %p51
    %p53 = scmp.ne.s32.totalorder %s45, %s47
    %p54 = scmp.eq.s32.totalorder %s16, 3
    %p55 = por %p53, %p54
    %p56 = scmp.ne.s32.totalorder %s47, %s48
    %p57 = scmp.eq.s32.totalorder %s16, 0
    %p58 = por %p56, %p57
    %p59 = scmp.ne.s32.totalorder %s47, %s48
    %p60 = scmp.eq.s32.totalorder %s17, 3
    %p61 = por %p59, %p60
    %p63 = scmp.ne.s32.totalorder %s48, %s62
    %p64 = scmp.eq.s32.totalorder %s17, 0
    %p65 = por %p63, %p64
    %s67 = sadd.s32 %s66, 1
    %p70 = scmp.eq.s32.totalorder %s11, 3
    %p71 = scmp.ne.s32.totalorder %s66, %s68
    %p72 = scmp.eq.s32.totalorder %s11, 0
    %p73 = por %p71, %p72
    %p74 = scmp.ne.s32.totalorder %s66, %s68
    %p75 = scmp.eq.s32.totalorder %s16, 3
    %p76 = por %p74, %p75
    %p77 = scmp.ne.s32.totalorder %s68, %s69
    %p78 = scmp.eq.s32.totalorder %s16, 0
    %p79 = por %p77, %p78
    %p80 = scmp.ne.s32.totalorder %s68, %s69
    %p81 = scmp.eq.s32.totalorder %s17, 3
    %p82 = por %p80, %p81
    %p84 = scmp.ne.s32.totalorder %s69, %s83
    %p85 = scmp.eq.s32.totalorder %s17, 0
    %p86 = por %p84, %p85
    %s87 = ssub.s32 %s11, %s18
    %p88 = scmp.eq.s32.totalorder %s87, 0
    %s90 = sadd.s32 %s89, 1
    %s91 = scalar_select %p88, %s89, %s90
    %p94 = pneg %p88
    %p95 = scmp.eq.s32.totalorder %s11, 3
    %p96 = por %p94, %p95
    %p97 = scmp.ne.s32.totalorder %s89, %s92
    %p98 = scmp.eq.s32.totalorder %s11, 0
    %p99 = por %p97, %p98
    %p100 = scmp.ne.s32.totalorder %s89, %s92
    %p101 = scmp.eq.s32.totalorder %s16, 3
    %p102 = por %p100, %p101
    %p103 = scmp.ne.s32.totalorder %s92, %s93
    %p104 = scmp.eq.s32.totalorder %s16, 0
    %p105 = por %p103, %p104
    %p106 = scmp.ne.s32.totalorder %s92, %s93
    %p107 = scmp.eq.s32.totalorder %s17, 3
    %p108 = por %p106, %p107
    %p110 = scmp.ne.s32.totalorder %s93, %s109
    %p111 = scmp.eq.s32.totalorder %s17, 0
    %p112 = por %p110, %p111
    %s113 = ssub.s32 %s11, %s18
    %p114 = scmp.eq.s32.totalorder %s113, 0
    %s116 = sadd.s32 %s115, 1
    %s117 = scalar_select %p114, %s115, %s116
    %p120 = pneg %p114
    %p121 = scmp.eq.s32.totalorder %s11, 3
    %p122 = por %p120, %p121
    %p123 = scmp.ne.s32.totalorder %s115, %s118
    %p124 = scmp.eq.s32.totalorder %s11, 0
    %p125 = por %p123, %p124
    %p126 = scmp.ne.s32.totalorder %s115, %s118
    %p127 = scmp.eq.s32.totalorder %s16, 3
    %p128 = por %p126, %p127
    %p129 = scmp.ne.s32.totalorder %s118, %s119
    %p130 = scmp.eq.s32.totalorder %s16, 0
    %p131 = por %p129, %p130
    %p132 = scmp.ne.s32.totalorder %s118, %s119
    %p133 = scmp.eq.s32.totalorder %s17, 3
    %p134 = por %p132, %p133
    %p136 = scmp.ne.s32.totalorder %s119, %s135
    %p137 = scmp.eq.s32.totalorder %s17, 0
    %p138 = por %p136, %p137
    %p139 = scmp.le.s32.totalorder 1, %s11
    %p140 = scmp.lt.s32.totalorder %s11, 5
    %p141 = pnand %p139, %p140
    %p142 = pneg %p141
    // Predicated region
    $region9: #{conv_bn_silu.2} parent=5 // pred_check
      _
    $region10: #{conv_bn_silu.2} parent=5 // pred_check_branch
      %144 = sbr.rel (%p141) target = $region12
    $region11: #{conv_bn_silu.2} parent=5 // pred_region
      %s145 = ssub.s32 %s11, 1
      // Predicated region
      $region13: #{conv_bn_silu.2} parent=11 // pred_check
        %p146 = pneg %p58
      $region14: #{conv_bn_silu.2} parent=11 // pred_check_branch
        %148 = sbr.rel (%p146) target = $region16
      $region15: #{conv_bn_silu.2} parent=11 // pred_region
        _
      $region16: #{conv_bn_silu.2} parent=11 // pred_fallthru
        _
      // Predicated region
      $region17: #{conv_bn_silu.2} parent=11 // pred_check
        %p149 = pneg %p79
      $region18: #{conv_bn_silu.2} parent=11 // pred_check_branch
        %151 = sbr.rel (%p149) target = $region20
      $region19: #{conv_bn_silu.2} parent=11 // pred_region
        _
      $region20: #{conv_bn_silu.2} parent=11 // pred_fallthru
        _
    $region12: #{conv_bn_silu.2} parent=5 // pred_fallthru
      _
    %p152 = scmp.lt.s32.totalorder %s11, 4
    // Predicated region
    $region21: #{conv_bn_silu.2} parent=5 // pred_check
      %p153 = pneg %p152
    $region22: #{conv_bn_silu.2} parent=5 // pred_check_branch
      %155 = sbr.rel (%p153) target = $region24
    $region23: #{conv_bn_silu.2} parent=5 // pred_region
      // Predicated region
      $region25: #{conv_bn_silu.2} parent=23 // pred_check
        %p156 = pneg %p31
      $region26: #{conv_bn_silu.2} parent=23 // pred_check_branch
        %158 = sbr.rel (%p156) target = $region28
      $region27: #{conv_bn_silu.2} parent=23 // pred_region
        %s159 = smul.u32 16, %s11
        %p160 = scmp.lt.s32.totalorder %s159, 63
        %s161 = scalar_select %p160, %s159, 63
        %s162 = smul.addr %s161, 4
        %s163 = scalar_lea.vmem %s0, %s162
        %s164 = smul.u32 16, %s11
      $region28: #{conv_bn_silu.2} parent=23 // pred_fallthru
        _
    $region24: #{conv_bn_silu.2} parent=5 // pred_fallthru
      _
    %p165 = scmp.le.s32.totalorder 1, %s11
    %p166 = scmp.lt.s32.totalorder %s11, 5
    %p167 = pnand %p165, %p166
    %p168 = pneg %p167
    // Predicated region
    $region29: #{conv_bn_silu.2} parent=5 // pred_check
      _
    $region30: #{conv_bn_silu.2} parent=5 // pred_check_branch
      %170 = sbr.rel (%p167) target = $region32
    $region31: #{conv_bn_silu.2} parent=5 // pred_region
      %s171 = ssub.s32 %s11, 1
      %s172 = smul.u32 16, %s16
      %p173 = scmp.lt.s32.totalorder %s172, 63
      %s174 = scalar_select %p173, %s172, 63
      %s175 = smul.addr %s174, 4
      %s176 = scalar_lea.vmem %s0, %s175
      %p177 = pneg %p37
      %p178 = pneg %p34
      %p179 = pneg %p58
      %p180 = pneg %p55
      %p181 = pneg %p79
      %p182 = pneg %p76
      %p183 = pneg %p105
      %p184 = pneg %p102
      %s185 = smul.u32 16, %s16
      %p186 = scmp.lt.s32.totalorder %s185, 63
      %s187 = scalar_select %p186, %s185, 63
      %s188 = smul.addr %s187, 8
      %s189 = scalar_lea.vmem %s3, %s188
      %p190 = pneg %p131
      %p191 = pneg %p128
      %p192 = scmp.lt.s32.totalorder %s16, 3
      %s193 = scalar_select %p192, %s16, 3
      %s194 = smul.addr %s193, 8
      %s195 = scalar_lea.vmem %s4, %s194
      %s196 = smul.u32 16, %s16
      %p197 = scmp.lt.s32.totalorder %s196, 63
      %s198 = scalar_select %p197, %s196, 63
      %s199 = smul.addr %s198, 4
      %s200 = scalar_lea.vmem %s0, %s199
      %s201 = smul.u32 16, %s16
      %s202 = smul.u32 16, %s16
      %p203 = scmp.lt.s32.totalorder %s202, 63
      %s204 = scalar_select %p203, %s202, 63
      %s205 = smul.addr %s204, 8
      %s206 = scalar_lea.vmem %s3, %s205
      %s207 = smul.u32 16, %s16
      %p208 = scmp.lt.s32.totalorder %s16, 3
      %s209 = scalar_select %p208, %s16, 3
      %s210 = smul.addr %s209, 8
      %s211 = scalar_lea.vmem %s4, %s210
      %v213 = vld [vmem:[%s200] sm:$0xf]
      %v214 = vld [vmem:[%s200 + $0x4] sm:$0xf]
      %v215 = vld [vmem:[%s200 + $0x8] sm:$0xf]
      %v216 = vld [vmem:[%s200 + $0xc] sm:$0xf]
      %v217 = vld [vmem:[%s200 + $0x10] sm:$0xf]
      %v218 = vld [vmem:[%s200 + $0x14] sm:$0xf]
      %v219 = vld [vmem:[%s200 + $0x18] sm:$0xf]
      %v220 = vld [vmem:[%s200 + $0x1c] sm:$0xf]
      %v221 = vld [vmem:[%s200 + $0x20] sm:$0xf]
      %v222 = vld [vmem:[%s200 + $0x24] sm:$0xf]
      %v223 = vld [vmem:[%s200 + $0x28] sm:$0xf]
      %v224 = vld [vmem:[%s200 + $0x2c] sm:$0xf]
      %v225 = vld [vmem:[%s200 + $0x30] sm:$0xf]
      %v226 = vld [vmem:[%s200 + $0x34] sm:$0xf]
      %v227 = vld [vmem:[%s200 + $0x38] sm:$0xf]
      %v228 = vld [vmem:[%s200 + $0x3c] sm:$0xf]
      %v229 = vld [vmem:[%s1] sm:$0xf]
      %v230 = vld [vmem:[%s1 + $0x4] sm:$0xf]
      %v231 = vld [vmem:[%s1 + $0x8] sm:$0xf]
      %v232 = vld [vmem:[%s1 + $0xc] sm:$0xf]
      %v233 = vld [vmem:[%s1 + $0x10] sm:$0x3]
      %v234 = vld [vmem:[%s2] sm:$0x1]
      %v236 = vperm.slane %v234, 0
      %v254 = vunpack.c.l.b16 %v213
      %v255 = vunpack.c.l.b16 %v214
      %v256 = vunpack.c.l.b16 %v215
      %v257 = vunpack.c.l.b16 %v216
      %v258 = vunpack.c.l.b16 %v217
      %v259 = vunpack.c.l.b16 %v218
      %v260 = vunpack.c.l.b16 %v219
      %v261 = vunpack.c.l.b16 %v220
      %v262 = vunpack.c.l.b16 %v221
      %v263 = vunpack.c.l.b16 %v222
      %v264 = vunpack.c.l.b16 %v223
      %v265 = vunpack.c.l.b16 %v224
      %v266 = vunpack.c.l.b16 %v225
      %v267 = vunpack.c.l.b16 %v226
      %v268 = vunpack.c.l.b16 %v227
      %v269 = vunpack.c.l.b16 %v228
      %v270 = vpack.c.b16 %v255, %v254
      %v271 = vpack.c.b16 %v257, %v256
      %v272 = vpack.c.b16 %v259, %v258
      %v273 = vpack.c.b16 %v261, %v260
      %v274 = vpack.c.b16 %v263, %v262
      %v275 = vpack.c.b16 %v265, %v264
      %v276 = vpack.c.b16 %v267, %v266
      %v277 = vpack.c.b16 %v269, %v268
      %v283 = vunpack.c.l.b16 %v229
      %v284 = vunpack.c.l.b16 %v230
      %v285 = vunpack.c.l.b16 %v231
      %v286 = vunpack.c.l.b16 %v232
      %v287 = vunpack.c.l.b16 %v233
      %v288 = vpack.c.b16 %v284, %v283
      %v289 = vpack.c.b16 %v286, %v285
      %v290 = vpack.c.b16 %v287, %v287
      %vm293 = vcmask 293888
      %v295 = vsel %vm293, %v270, 0
      %v298 = vsel %vm293, %v271, 0
      %v301 = vsel %vm293, %v272, 0
      %v304 = vsel %vm293, %v273, 0
      %v307 = vsel %vm293, %v274, 0
      %v310 = vsel %vm293, %v275, 0
      %v313 = vsel %vm293, %v276, 0
      %v316 = vsel %vm293, %v277, 0
      %vm318 = vcmask 1041408
      %v320 = vsel %vm318, %v290, 0
      %322 = vmatpush.bf16.msra.mxu0 0
      %323 = vmatpush.bf16.msra.mxu0 0
      %324 = vmatpush.bf16.msra.mxu0 0
      %325 = vmatpush.bf16.msra.mxu0 0
      %326 = vmatpush.bf16.msra.mxu0 0
      %327 = vmatpush.bf16.msra.mxu0 %v320
      %328 = vmatpush.bf16.msra.mxu0 %v289
      %329 = vmatpush.bf16.msra.mxu0 %v288
      %330 = vmatmul.bf16.gmra.mxu0 %v295
      %v331 = vpop.f32.mrf.mxu0
      %v332 = vadd.f32 %v236, %v331
      %v333 = vpop.f32.mrf.mxu0
      %v334 = vadd.f32 %v236, %v333
      %335 = vmatmul.bf16.gmra.mxu0 %v298
      %v336 = vpop.f32.mrf.mxu0
      %v337 = vadd.f32 %v236, %v336
      %v338 = vpop.f32.mrf.mxu0
      %v339 = vadd.f32 %v236, %v338
      %340 = vmatmul.bf16.gmra.mxu0 %v301
      %v341 = vpop.f32.mrf.mxu0
      %v342 = vadd.f32 %v236, %v341
      %v343 = vpop.f32.mrf.mxu0
      %v344 = vadd.f32 %v236, %v343
      %345 = vmatmul.bf16.gmra.mxu0 %v304
      %v346 = vpop.f32.mrf.mxu0
      %v347 = vadd.f32 %v236, %v346
      %v348 = vpop.f32.mrf.mxu0
      %v349 = vadd.f32 %v236, %v348
      %350 = vmatmul.bf16.gmra.mxu0 %v307
      %v351 = vpop.f32.mrf.mxu0
      %v352 = vadd.f32 %v236, %v351
      %v353 = vpop.f32.mrf.mxu0
      %v354 = vadd.f32 %v236, %v353
      %355 = vmatmul.bf16.gmra.mxu0 %v310
      %v356 = vpop.f32.mrf.mxu0
      %v357 = vadd.f32 %v236, %v356
      %v358 = vpop.f32.mrf.mxu0
      %v359 = vadd.f32 %v236, %v358
      %360 = vmatmul.bf16.gmra.mxu0 %v313
      %v361 = vpop.f32.mrf.mxu0
      %v362 = vadd.f32 %v236, %v361
      %v363 = vpop.f32.mrf.mxu0
      %v364 = vadd.f32 %v236, %v363
      %365 = vmatmul.bf16.gmra.mxu0 %v316
      %v366 = vpop.f32.mrf.mxu0
      %v367 = vadd.f32 %v236, %v366
      %v368 = vpop.f32.mrf.mxu0
      %v369 = vadd.f32 %v236, %v368
      %370 = vdwg.mxu0
      %371 = vst [vmem:[%s206] sm:$0xff] %v332
      %372 = vst [vmem:[%s206 + $0x8] sm:$0xff] %v334
      %373 = vst [vmem:[%s206 + $0x10] sm:$0xff] %v337
      %374 = vst [vmem:[%s206 + $0x18] sm:$0xff] %v339
      %375 = vst [vmem:[%s206 + $0x20] sm:$0xff] %v342
      %376 = vst [vmem:[%s206 + $0x28] sm:$0xff] %v344
      %377 = vst [vmem:[%s206 + $0x30] sm:$0xff] %v347
      %378 = vst [vmem:[%s206 + $0x38] sm:$0xff] %v349
      %379 = vst [vmem:[%s206 + $0x40] sm:$0xff] %v352
      %380 = vst [vmem:[%s206 + $0x48] sm:$0xff] %v354
      %381 = vst [vmem:[%s206 + $0x50] sm:$0xff] %v357
      %382 = vst [vmem:[%s206 + $0x58] sm:$0xff] %v359
      %383 = vst [vmem:[%s206 + $0x60] sm:$0xff] %v362
      %384 = vst [vmem:[%s206 + $0x68] sm:$0xff] %v364
      %385 = vst [vmem:[%s206 + $0x70] sm:$0xff] %v367
      %386 = vst [vmem:[%s206 + $0x78] sm:$0xff] %v369
      %s387 = smul.u32 %s16, 128
      %v388 = vlaneseq
      %v389 = vshrl.u32 %v388, 7
      %v390 = vadd.s32 %v389, 8
      %v391 = vadd.s32 %v389, 16
      %v392 = vadd.s32 %v389, 24
      %v393 = vadd.s32 %v389, 32
      %v394 = vadd.s32 %v389, 40
      %v395 = vadd.s32 %v389, 48
      %v396 = vadd.s32 %v389, 56
      %v397 = vadd.s32 %v389, 64
      %v398 = vadd.s32 %v389, 72
      %v399 = vadd.s32 %v389, 80
      %v400 = vadd.s32 %v389, 88
      %v401 = vadd.s32 %v389, 96
      %v402 = vadd.s32 %v389, 104
      %v403 = vadd.s32 %v389, 112
      %v404 = vadd.s32 %v389, 120
      %v405 = vstv %s387
      %v406 = vadd.s32 %v405, %v389
      %v407 = vadd.s32 %v405, %v390
      %v408 = vadd.s32 %v405, %v391
      %v409 = vadd.s32 %v405, %v392
      %v410 = vadd.s32 %v405, %v393
      %v411 = vadd.s32 %v405, %v394
      %v412 = vadd.s32 %v405, %v395
      %v413 = vadd.s32 %v405, %v396
      %v414 = vadd.s32 %v405, %v397
      %v415 = vadd.s32 %v405, %v398
      %v416 = vadd.s32 %v405, %v399
      %v417 = vadd.s32 %v405, %v400
      %v418 = vadd.s32 %v405, %v401
      %v419 = vadd.s32 %v405, %v402
      %v420 = vadd.s32 %v405, %v403
      %v421 = vadd.s32 %v405, %v404
      %vm422 = vcmp.lt.s32.totalorder %v406, 512
      %vm423 = vcmp.lt.s32.totalorder %v407, 512
      %vm424 = vcmp.lt.s32.totalorder %v408, 512
      %vm425 = vcmp.lt.s32.totalorder %v409, 512
      %vm426 = vcmp.lt.s32.totalorder %v410, 512
      %vm427 = vcmp.lt.s32.totalorder %v411, 512
      %vm428 = vcmp.lt.s32.totalorder %v412, 512
      %vm429 = vcmp.lt.s32.totalorder %v413, 512
      %vm430 = vcmp.lt.s32.totalorder %v414, 512
      %vm431 = vcmp.lt.s32.totalorder %v415, 512
      %vm432 = vcmp.lt.s32.totalorder %v416, 512
      %vm433 = vcmp.lt.s32.totalorder %v417, 512
      %vm434 = vcmp.lt.s32.totalorder %v418, 512
      %vm435 = vcmp.lt.s32.totalorder %v419, 512
      %vm436 = vcmp.lt.s32.totalorder %v420, 512
      %vm437 = vcmp.lt.s32.totalorder %v421, 512
      %v438 = vsel %vm422, 1, 0
      %v439 = vsel %vm423, 1, 0
      %v440 = vsel %vm424, 1, 0
      %v441 = vsel %vm425, 1, 0
      %v442 = vsel %vm426, 1, 0
      %v443 = vsel %vm427, 1, 0
      %v444 = vsel %vm428, 1, 0
      %v445 = vsel %vm429, 1, 0
      %v446 = vsel %vm430, 1, 0
      %v447 = vsel %vm431, 1, 0
      %v448 = vsel %vm432, 1, 0
      %v449 = vsel %vm433, 1, 0
      %v450 = vsel %vm434, 1, 0
      %v451 = vsel %vm435, 1, 0
      %v452 = vsel %vm436, 1, 0
      %v453 = vsel %vm437, 1, 0
      %v454 = vcvt.s32.f32 %v438
      %v455 = vcvt.s32.f32 %v439
      %v456 = vcvt.s32.f32 %v440
      %v457 = vcvt.s32.f32 %v441
      %v458 = vcvt.s32.f32 %v442
      %v459 = vcvt.s32.f32 %v443
      %v460 = vcvt.s32.f32 %v444
      %v461 = vcvt.s32.f32 %v445
      %v462 = vcvt.s32.f32 %v446
      %v463 = vcvt.s32.f32 %v447
      %v464 = vcvt.s32.f32 %v448
      %v465 = vcvt.s32.f32 %v449
      %v466 = vcvt.s32.f32 %v450
      %v467 = vcvt.s32.f32 %v451
      %v468 = vcvt.s32.f32 %v452
      %v469 = vcvt.s32.f32 %v453
      %v470 = vmul.f32 %v332, %v454
      %v471 = vmul.f32 %v334, %v455
      %v472 = vmul.f32 %v337, %v456
      %v473 = vmul.f32 %v339, %v457
      %v474 = vmul.f32 %v342, %v458
      %v475 = vmul.f32 %v344, %v459
      %v476 = vmul.f32 %v347, %v460
      %v477 = vmul.f32 %v349, %v461
      %v478 = vmul.f32 %v352, %v462
      %v479 = vmul.f32 %v354, %v463
      %v480 = vmul.f32 %v357, %v464
      %v481 = vmul.f32 %v359, %v465
      %v482 = vmul.f32 %v362, %v466
      %v483 = vmul.f32 %v364, %v467
      %v484 = vmul.f32 %v367, %v468
      %v485 = vmul.f32 %v369, %v469
      %v486 = vadd.f32 %v470, %v471
      %v487 = vadd.f32 %v486, %v472
      %v488 = vadd.f32 %v487, %v473
      %v489 = vadd.f32 %v488, %v474
      %v490 = vadd.f32 %v489, %v475
      %v491 = vadd.f32 %v490, %v476
      %v492 = vadd.f32 %v491, %v477
      %v493 = vadd.f32 %v492, %v478
      %v494 = vadd.f32 %v493, %v479
      %v495 = vadd.f32 %v494, %v480
      %v496 = vadd.f32 %v495, %v481
      %v497 = vadd.f32 %v496, %v482
      %v498 = vadd.f32 %v497, %v483
      %v499 = vadd.f32 %v498, %v484
      %v500 = vadd.f32 %v499, %v485
      %v501 = vrot.slane %v500, 4
      %v502 = vadd.f32 %v500, %v501
      %v503 = vrot.slane %v502, 2
      %v504 = vadd.f32 %v502, %v503
      %v505 = vrot.slane %v504, 1
      %v506 = vadd.f32 %v504, %v505
      %v507 = vmul.f32 %v470, %v332
      %v508 = vmul.f32 %v471, %v334
      %v509 = vmul.f32 %v472, %v337
      %v510 = vmul.f32 %v473, %v339
      %v511 = vmul.f32 %v474, %v342
      %v512 = vmul.f32 %v475, %v344
      %v513 = vmul.f32 %v476, %v347
      %v514 = vmul.f32 %v477, %v349
      %v515 = vmul.f32 %v478, %v352
      %v516 = vmul.f32 %v479, %v354
      %v517 = vmul.f32 %v480, %v357
      %v518 = vmul.f32 %v481, %v359
      %v519 = vmul.f32 %v482, %v362
      %v520 = vmul.f32 %v483, %v364
      %v521 = vmul.f32 %v484, %v367
      %v522 = vmul.f32 %v485, %v369
      %v523 = vadd.f32 %v507, %v508
      %v524 = vadd.f32 %v523, %v509
      %v525 = vadd.f32 %v524, %v510
      %v526 = vadd.f32 %v525, %v511
      %v527 = vadd.f32 %v526, %v512
      %v528 = vadd.f32 %v527, %v513
      %v529 = vadd.f32 %v528, %v514
      %v530 = vadd.f32 %v529, %v515
      %v531 = vadd.f32 %v530, %v516
      %v532 = vadd.f32 %v531, %v517
      %v533 = vadd.f32 %v532, %v518
      %v534 = vadd.f32 %v533, %v519
      %v535 = vadd.f32 %v534, %v520
      %v536 = vadd.f32 %v535, %v521
      %v537 = vadd.f32 %v536, %v522
      %v538 = vrot.slane %v537, 4
      %v539 = vadd.f32 %v537, %v538
      %v540 = vrot.slane %v539, 2
      %v541 = vadd.f32 %v539, %v540
      %v542 = vrot.slane %v541, 1
      %v543 = vadd.f32 %v541, %v542
      %vm544 = vcmask 1040384
      %v545 = vsel %vm544, %v506, %v543
      %v546 = vsel %vm318, %v545, 0.0
      %547 = vst [vmem:[%s211] sm:$0xff] %v546
      %s548 = smul.u32 16, %s16
      %p549 = scmp.lt.s32.totalorder %s548, 63
      %s550 = scalar_select %p549, %s548, 63
      %s551 = smul.addr %s550, 8
      %s552 = scalar_lea.vmem %s3, %s551
      %p553 = scmp.lt.s32.totalorder %s16, 3
      %s554 = scalar_select %p553, %s16, 3
      %s555 = smul.addr %s554, 8
      %s556 = scalar_lea.vmem %s4, %s555
      // Predicated region
      $region33: #{conv_bn_silu.2} parent=31 // pred_check
        %p557 = pneg %p102
      $region34: #{conv_bn_silu.2} parent=31 // pred_check_branch
        %559 = sbr.rel (%p557) target = $region36
      $region35: #{conv_bn_silu.2} parent=31 // pred_region
        %s560 = smul.u32 16, %s16
      $region36: #{conv_bn_silu.2} parent=31 // pred_fallthru
        _
      // Predicated region
      $region37: #{conv_bn_silu.2} parent=31 // pred_check
        %p561 = pneg %p128
      $region38: #{conv_bn_silu.2} parent=31 // pred_check_branch
        %563 = sbr.rel (%p561) target = $region40
      $region39: #{conv_bn_silu.2} parent=31 // pred_region
        _
      $region40: #{conv_bn_silu.2} parent=31 // pred_fallthru
        _
    $region32: #{conv_bn_silu.2} parent=5 // pred_fallthru
      _
    %p564 = scmp.le.s32.totalorder 2, %s11
    // Predicated region
    $region41: #{conv_bn_silu.2} parent=5 // pred_check
      %p565 = pneg %p564
    $region42: #{conv_bn_silu.2} parent=5 // pred_check_branch
      %567 = sbr.rel (%p565) target = $region44
    $region43: #{conv_bn_silu.2} parent=5 // pred_region
      %s568 = ssub.s32 %s11, 2
      // Predicated region
      $region45: #{conv_bn_silu.2} parent=43 // pred_check
        %p569 = pneg %p108
      $region46: #{conv_bn_silu.2} parent=43 // pred_check_branch
        %571 = sbr.rel (%p569) target = $region48
      $region47: #{conv_bn_silu.2} parent=43 // pred_region
        %s572 = smul.u32 16, %s17
        %p573 = scmp.lt.s32.totalorder %s572, 63
        %s574 = scalar_select %p573, %s572, 63
        %s575 = smul.addr %s574, 8
        %s576 = scalar_lea.vmem %s3, %s575
      $region48: #{conv_bn_silu.2} parent=43 // pred_fallthru
        _
      // Predicated region
      $region49: #{conv_bn_silu.2} parent=43 // pred_check
        %p577 = pneg %p134
      $region50: #{conv_bn_silu.2} parent=43 // pred_check_branch
        %579 = sbr.rel (%p577) target = $region52
      $region51: #{conv_bn_silu.2} parent=43 // pred_region
        %p580 = scmp.lt.s32.totalorder %s17, 3
        %s581 = scalar_select %p580, %s17, 3
        %s582 = smul.addr %s581, 8
        %s583 = scalar_lea.vmem %s4, %s582
      $region52: #{conv_bn_silu.2} parent=43 // pred_fallthru
        _
    $region44: #{conv_bn_silu.2} parent=5 // pred_fallthru
      _
  $region6: #{conv_bn_silu.2} parent=0 // loop_footer
    %s15 = sadd.s32 1, %s11
  $region7: #{conv_bn_silu.2} parent=0 // loop_footer_branch
    %10 = sbr.rel target = $region3
  $region8: #{conv_bn_silu.2} parent=0 // loop_exit
    _

</llo_original>
